<compile_context>
chip_gen: v7x
topology: tpu7x:2x2x1
jax: 0.10.0
libtpu: 0.0.40
codegen_flags: <defaults>
</compile_context>

<pallas_src>
import functools

import jax
import jax.numpy as jnp
from jax.experimental import pallas as pl
from jax.experimental.pallas import tpu as pltpu


# ----------------------------------------------------------------------------
# Kernel: per-pixel affine map  out[n, c, p] = x[n, p] * u[c] + d[c]
# ----------------------------------------------------------------------------
def _affine_kernel(x_ref, u_ref, d_ref, o_ref):
    x = x_ref[...]          # [N, HW]   (pixel values, lane-major over pixels)
    u = u_ref[...]          # [tc, 1]   (per-channel scale, sublane-major)
    d = d_ref[...]          # [tc, 1]   (per-channel offset)
    # Pure VPU broadcast FMA -> [N, tc, HW]; channels land on sublanes so the
    # store is already in NCHW order.
    o_ref[...] = x[:, None, :] * u[None, :, :] + d[None, :, :]


def affine_forward(x2, u, d, *, tc=256):
    """x2: [N, HW] pixel matrix; u, d: [C, 1]. Returns [N, C, HW]."""
    n, hw = x2.shape
    c_out = u.shape[0]
    tc = min(tc, c_out)
    assert c_out % tc == 0, f"C={c_out} must be divisible by tc={tc}"

    return pl.pallas_call(
        _affine_kernel,
        out_shape=jax.ShapeDtypeStruct((n, c_out, hw), x2.dtype),
        grid_spec=pltpu.PrefetchScalarGridSpec(
            num_scalar_prefetch=0,
            grid=(c_out // tc,),
            in_specs=[
                # Whole x column matrix (tiny: N*HW*4 bytes), fetched once.
                pl.BlockSpec((n, hw), lambda j: (0, 0)),
                # Per-channel scale / offset, tiled along channels.
                pl.BlockSpec((tc, 1), lambda j: (j, 0)),
                pl.BlockSpec((tc, 1), lambda j: (j, 0)),
            ],
            # Channel-major output block: NCHW comes out as a free reshape.
            out_specs=pl.BlockSpec((n, tc, hw), lambda j: (0, j, 0)),
        ),
        compiler_params=pltpu.CompilerParams(
            # Channel tiles are independent -> megacore-splittable on v7x.
            dimension_semantics=("parallel",),
        ),
    )(x2, u, d)


# ----------------------------------------------------------------------------
# Deterministic parameter construction (mirrors create_conv + the += i loops).
#   create_conv(cin, cout, 1, weight_init=1, bias_init=1):
#       weight = 1 everywhere, then += eye(1) -> 2 everywhere;  bias = 1
#   then weight.data[i] += i  ->  every entry of output-channel i equals 2 + i
# ----------------------------------------------------------------------------
def make_conv_params(cin, cout, dtype=jnp.float32):
    per_out = 2.0 + jnp.arange(cout, dtype=dtype)            # [cout]
    w_t = jnp.broadcast_to(per_out[None, :], (cin, cout))    # [cin, cout] (W^T)
    b = jnp.ones((cout,), dtype=dtype)
    return w_t, b


class PruningTestWideModelConcatPallas:
    def __init__(self):
        # Original per-layer parameters (kept for the reference check).
        self.w1_t, self.b1 = make_conv_params(1, 512)             # [1,512], [512]
        w2_t, b2 = make_conv_params(512, 1024)
        w3_t, b3 = make_conv_params(512, 1024)
        # Channel concat of conv2/conv3 == concat of weight columns / biases.
        self.w23_t = jnp.concatenate([w2_t, w3_t], axis=1)        # [512, 2048]
        self.b23 = jnp.concatenate([b2, b3], axis=0)              # [2048]
        self.w4_t, self.b4 = make_conv_params(2048, 2048)         # [2048, 2048]

        # Host-side fold of the purely-linear chain (valid: no activations,
        # C_in == 1).  Done once at full f32 precision.
        hp = jax.lax.Precision.HIGHEST
        u12 = jnp.dot(self.w1_t, self.w23_t, precision=hp)                    # [1, 2048]
        c12 = jnp.dot(self.b1[None, :], self.w23_t, precision=hp) + self.b23  # [1, 2048]
        u = jnp.dot(u12, self.w4_t, precision=hp)                             # [1, 2048]
        d = jnp.dot(c12, self.w4_t, precision=hp) + self.b4[None, :]          # [1, 2048]
        # Column layout so the channel axis is sublane-major inside the kernel.
        self.u = u.reshape(-1, 1)                                 # [2048, 1]
        self.d = d.reshape(-1, 1)                                 # [2048, 1]

    @functools.partial(jax.jit, static_argnums=0)
    def __call__(self, x):
        # x: [N, 1, H, W] (NCHW, like PyTorch).
        n, c, h, w = x.shape
        assert c == 1, "fold assumes a single input channel"
        hw = h * w
        x2 = x.reshape(n, hw)                        # free reshape (C == 1)
        out = affine_forward(x2, self.u, self.d)     # [N, 2048, HW], channel-major
        return out.reshape(n, self.u.shape[0], h, w)  # free reshape -> NCHW


def _reference(model, x):
    # Plain-JAX reference of the full (unfolded) conv chain at full precision.
    n, c, h, w = x.shape
    hp = jax.lax.Precision.HIGHEST
    xf = jnp.transpose(x, (0, 2, 3, 1)).reshape(n * h * w, c)
    h1 = jnp.dot(xf, model.w1_t, precision=hp) + model.b1
    h2 = jnp.dot(h1, model.w23_t, precision=hp) + model.b23
    out = jnp.dot(h2, model.w4_t, precision=hp) + model.b4
    return jnp.transpose(out.reshape(n, h, w, 2048), (0, 3, 1, 2))


if __name__ == "__main__":
    key = jax.random.PRNGKey(0)
    # Small input consistent with the module: NCHW, 1 input channel.
    x = jax.random.normal(key, (2, 1, 8, 8), dtype=jnp.float32)

    model = PruningTestWideModelConcatPallas()
    out = jax.block_until_ready(model(x))

    assert out.shape == (2, 2048, 8, 8), out.shape

    ref = _reference(model, x)
    err = jnp.max(jnp.abs(out - ref) / (jnp.abs(ref) + 1e-6))
    assert float(err) < 1e-3, f"mismatch vs reference: {float(err)}"

    print("KERNEL_OK")
</pallas_src>

<mosaic_0001>
module attributes {stable_mosaic.version = 11 : i64} {
  func.func @_affine_kernel(%arg0: i32, %arg1: memref<2x64xf32, #tpu.memory_space<vmem>>, %arg2: memref<256x1xf32, #tpu.memory_space<vmem>>, %arg3: memref<256x1xf32, #tpu.memory_space<vmem>>, %arg4: memref<2x256x64xf32, #tpu.memory_space<vmem>>) attributes {dimension_semantics = [#tpu.dimension_semantics<parallel>], iteration_bounds = array<i64: 8>, scalar_prefetch = 0 : i64, scratch_operands = 0 : i64, tpu.core_type = #tpu.core_type<tc>, window_params = [{pipeline_mode = #tpu.pipeline_mode<synchronous>, transform_indices = @transform_0, window_bounds = array<i64: 2, 64>}, {transform_indices = @transform_1, window_bounds = array<i64: 256, 1>}, {transform_indices = @transform_2, window_bounds = array<i64: 256, 1>}, {transform_indices = @transform_3, window_bounds = array<i64: 2, 256, 64>}]} {
    %c0 = arith.constant 0 : index
    %c0_0 = arith.constant 0 : index
    %0 = vector.load %arg1[%c0, %c0_0] : memref<2x64xf32, #tpu.memory_space<vmem>>, vector<2x64xf32>
    %c0_1 = arith.constant 0 : index
    %c0_2 = arith.constant 0 : index
    %1 = vector.load %arg2[%c0_1, %c0_2] : memref<256x1xf32, #tpu.memory_space<vmem>>, vector<256x1xf32>
    %c0_3 = arith.constant 0 : index
    %c0_4 = arith.constant 0 : index
    %2 = vector.load %arg3[%c0_3, %c0_4] : memref<256x1xf32, #tpu.memory_space<vmem>>, vector<256x1xf32>
    %3 = vector.shape_cast %0 : vector<2x64xf32> to vector<2x1x64xf32>
    %4 = vector.shape_cast %1 : vector<256x1xf32> to vector<1x256x1xf32>
    %5 = vector.broadcast %3 : vector<2x1x64xf32> to vector<2x256x64xf32>
    %6 = vector.broadcast %4 : vector<1x256x1xf32> to vector<2x256x64xf32>
    %7 = arith.mulf %5, %6 : vector<2x256x64xf32>
    %8 = vector.shape_cast %2 : vector<256x1xf32> to vector<1x256x1xf32>
    %9 = vector.broadcast %8 : vector<1x256x1xf32> to vector<2x256x64xf32>
    %10 = arith.addf %7, %9 : vector<2x256x64xf32>
    %c0_5 = arith.constant 0 : index
    %c0_6 = arith.constant 0 : index
    %c0_7 = arith.constant 0 : index
    %11 = vector.load %arg4[%c0_5, %c0_6, %c0_7] : memref<2x256x64xf32, #tpu.memory_space<vmem>>, vector<2x256x64xf32>
    tpu.vector_store %arg4[%c0_5, %c0_6, %c0_7], %10 {strides = array<i32>} : memref<2x256x64xf32, #tpu.memory_space<vmem>>, vector<2x256x64xf32>,
    return
  }
  func.func @transform_0(%arg0: i32) -> (i32, i32) {
    %c0_i32 = arith.constant 0 : i32
    %c0_i32_0 = arith.constant 0 : i32
    %c0_i32_1 = arith.constant 0 : i32
    return %c0_i32, %c0_i32_0 : i32, i32
  }
  func.func @transform_1(%arg0: i32) -> (i32, i32) {
    %c0_i32 = arith.constant 0 : i32
    %c0_i32_0 = arith.constant 0 : i32
    return %arg0, %c0_i32 : i32, i32
  }
  func.func @transform_2(%arg0: i32) -> (i32, i32) {
    %c0_i32 = arith.constant 0 : i32
    %c0_i32_0 = arith.constant 0 : i32
    return %arg0, %c0_i32 : i32, i32
  }
  func.func @transform_3(%arg0: i32) -> (i32, i32, i32) {
    %c0_i32 = arith.constant 0 : i32
    %c0_i32_0 = arith.constant 0 : i32
    %c0_i32_1 = arith.constant 0 : i32
    return %c0_i32, %arg0, %c0_i32_0 : i32, i32, i32
  }
}

</mosaic_0001>

<llo_original>
// kernel: a_call__.1
$region0: #{a_call__.1}
  #allocation0 [shape = 'u32[]', space=smem, size = 0x4, offset = 0x4, fixed_abs, tag = 'smem constant byte address 0x4 - core index']
  #allocation1 [shape = 'u32[144,128]{1,0:T(1,128)}', space=vmem, size = 0x12000, scoped, tag = 'internal scratch']
  %s0 = inlined_call_operand.vmem [shape: f32[2,64], index: 0, kind: input, shape index: {}]
  %s1 = inlined_call_operand.hbm [shape: f32[2048,1], index: 1, kind: input, shape index: {}]
  %s2 = inlined_call_operand.hbm [shape: f32[2048,1], index: 2, kind: input, shape index: {}]
  %s3 = inlined_call_operand.vmem [shape: f32[2,2048,64], index: 3, kind: output, shape index: {}]
  %s4 = sld [smem:[#allocation0]]
  $region87: #{a_call__.1} parent=0
    _
  %s6 = ssub.s32 1, %s4
  %s7 = scalar_select 0, %s6, %s4
  $region1: #{a_call__.1} parent=0
    #allocation2 [shape = 'u8[262144]{0}', space=vmem, size = 0x40000, scoped, tag = 'input window, operand 1']
    #allocation3 [shape = 's32[2]{0}', space=sflag, size = 0x8, scoped, tag = 'scoped memory for a_call__.1']
    #allocation4 [shape = 'u8[262144]{0}', space=vmem, size = 0x40000, scoped, tag = 'input window, operand 2']
    #allocation5 [shape = 's32[2]{0}', space=sflag, size = 0x8, scoped, tag = 'scoped memory for a_call__.1']
    #allocation6 [shape = 'u8[524288]{0}', space=vmem, size = 0x80000, scoped, tag = 'output window, operand 0']
    %8 = vsyncpa [#allocation3], 0
    %s9 = scalar_lea.sflag [#allocation3], 1
    %10 = vsyncpa %s9, 0
    %11 = vsyncpa [#allocation5], 0
    %s12 = scalar_lea.sflag [#allocation5], 1
    %13 = vsyncpa %s12, 0
    loop: start=0, step=1, limit=10
    $region2: #{a_call__.1} parent=1 // loop_pre_header
      _
    $region3: #{a_call__.1} parent=1 // loop_header
      %s15 = sphi 0, %s19
      %p16 = scmp.ge.s32.totalorder %s15, 10
      %s23 = sphi 0, %s23
      %s25 = sphi 0, %s23
      %s26 = sphi 0, %s25
      %s40 = sphi 0, %s26
      %s46 = sphi 0, %s48
      %s49 = sphi 0, %s46
      %s50 = sphi 0, %s49
      %s66 = sphi 0, %s50
      %s72 = sphi 0, %s74
      %s75 = sphi 0, %s72
      %s76 = sphi 0, %s75
      %s92 = sphi 0, %s76
      %s98 = sphi 0, %s100
      %s101 = sphi 0, %s98
      %s102 = sphi 0, %s101
      %s118 = sphi 0, %s102
    $region4: #{a_call__.1} parent=1 // loop_header_branch
      %18 = sbr.rel (%p16) target = $region8
    $region5: #{a_call__.1} parent=1 // loop_body
      %s20 = ssub.s32 %s15, 1
      %s21 = ssub.s32 %s15, 2
      %s22 = sadd.s32 %s15, 1
      %s24 = sadd.s32 %s23, 1
      %p27 = scmp.eq.s32.totalorder %s15, 7
      %p28 = scmp.ne.s32.totalorder %s23, %s25
      %p29 = scmp.eq.s32.totalorder %s15, 0
      %p30 = por %p28, %p29
      %p31 = scmp.ne.s32.totalorder %s23, %s25
      %p32 = scmp.eq.s32.totalorder %s20, 7
      %p33 = por %p31, %p32
      %p34 = scmp.ne.s32.totalorder %s25, %s26
      %p35 = scmp.eq.s32.totalorder %s20, 0
      %p36 = por %p34, %p35
      %p37 = scmp.ne.s32.totalorder %s25, %s26
      %p38 = scmp.eq.s32.totalorder %s21, 7
      %p39 = por %p37, %p38
      %p41 = scmp.ne.s32.totalorder %s26, %s40
      %p42 = scmp.eq.s32.totalorder %s21, 0
      %p43 = por %p41, %p42
      %s44 = ssub.s32 %s15, %s22
      %p45 = scmp.eq.s32.totalorder %s44, 0
      %s47 = sadd.s32 %s46, 1
      %s48 = scalar_select %p45, %s46, %s47
      %p51 = pneg %p45
      %p52 = scmp.eq.s32.totalorder %s15, 7
      %p53 = por %p51, %p52
      %p54 = scmp.ne.s32.totalorder %s46, %s49
      %p55 = scmp.eq.s32.totalorder %s15, 0
      %p56 = por %p54, %p55
      %p57 = scmp.ne.s32.totalorder %s46, %s49
      %p58 = scmp.eq.s32.totalorder %s20, 7
      %p59 = por %p57, %p58
      %p60 = scmp.ne.s32.totalorder %s49, %s50
      %p61 = scmp.eq.s32.totalorder %s20, 0
      %p62 = por %p60, %p61
      %p63 = scmp.ne.s32.totalorder %s49, %s50
      %p64 = scmp.eq.s32.totalorder %s21, 7
      %p65 = por %p63, %p64
      %p67 = scmp.ne.s32.totalorder %s50, %s66
      %p68 = scmp.eq.s32.totalorder %s21, 0
      %p69 = por %p67, %p68
      %s70 = ssub.s32 %s15, %s22
      %p71 = scmp.eq.s32.totalorder %s70, 0
      %s73 = sadd.s32 %s72, 1
      %s74 = scalar_select %p71, %s72, %s73
      %p77 = pneg %p71
      %p78 = scmp.eq.s32.totalorder %s15, 7
      %p79 = por %p77, %p78
      %p80 = scmp.ne.s32.totalorder %s72, %s75
      %p81 = scmp.eq.s32.totalorder %s15, 0
      %p82 = por %p80, %p81
      %p83 = scmp.ne.s32.totalorder %s72, %s75
      %p84 = scmp.eq.s32.totalorder %s20, 7
      %p85 = por %p83, %p84
      %p86 = scmp.ne.s32.totalorder %s75, %s76
      %p87 = scmp.eq.s32.totalorder %s20, 0
      %p88 = por %p86, %p87
      %p89 = scmp.ne.s32.totalorder %s75, %s76
      %p90 = scmp.eq.s32.totalorder %s21, 7
      %p91 = por %p89, %p90
      %p93 = scmp.ne.s32.totalorder %s76, %s92
      %p94 = scmp.eq.s32.totalorder %s21, 0
      %p95 = por %p93, %p94
      %s96 = ssub.s32 %s15, %s22
      %p97 = scmp.eq.s32.totalorder %s96, 0
      %s99 = sadd.s32 %s98, 1
      %s100 = scalar_select %p97, %s98, %s99
      %p103 = pneg %p97
      %p104 = scmp.eq.s32.totalorder %s15, 7
      %p105 = por %p103, %p104
      %p106 = scmp.ne.s32.totalorder %s98, %s101
      %p107 = scmp.eq.s32.totalorder %s15, 0
      %p108 = por %p106, %p107
      %p109 = scmp.ne.s32.totalorder %s98, %s101
      %p110 = scmp.eq.s32.totalorder %s20, 7
      %p111 = por %p109, %p110
      %p112 = scmp.ne.s32.totalorder %s101, %s102
      %p113 = scmp.eq.s32.totalorder %s20, 0
      %p114 = por %p112, %p113
      %p115 = scmp.ne.s32.totalorder %s101, %s102
      %p116 = scmp.eq.s32.totalorder %s21, 7
      %p117 = por %p115, %p116
      %p119 = scmp.ne.s32.totalorder %s102, %s118
      %p120 = scmp.eq.s32.totalorder %s21, 0
      %p121 = por %p119, %p120
      %p122 = scmp.le.s32.totalorder 1, %s15
      %p123 = scmp.lt.s32.totalorder %s15, 9
      %p124 = pnand %p122, %p123
      %p125 = pneg %p124
      // Predicated region
      $region9: #{a_call__.1} parent=5 // pred_check
        _
      $region10: #{a_call__.1} parent=5 // pred_check_branch
        %127 = sbr.rel (%p124) target = $region12
      $region11: #{a_call__.1} parent=5 // pred_region
        %s128 = ssub.s32 %s15, 1
        // Predicated region
        $region13: #{a_call__.1} parent=11 // pred_check
          %p129 = pneg %p36
        $region14: #{a_call__.1} parent=11 // pred_check_branch
          %131 = sbr.rel (%p129) target = $region16
        $region15: #{a_call__.1} parent=11 // pred_region
          _
        $region16: #{a_call__.1} parent=11 // pred_fallthru
          _
      $region12: #{a_call__.1} parent=5 // pred_fallthru
        _
      %p132 = scmp.lt.s32.totalorder %s15, 8
      // Predicated region
      $region17: #{a_call__.1} parent=5 // pred_check
        %p133 = pneg %p132
      $region18: #{a_call__.1} parent=5 // pred_check_branch
        %135 = sbr.rel (%p133) target = $region20
      $region19: #{a_call__.1} parent=5 // pred_region
        // Predicated region
        $region21: #{a_call__.1} parent=19 // pred_check
          %p136 = pneg %p56
        $region22: #{a_call__.1} parent=19 // pred_check_branch
          %138 = sbr.rel (%p136) target = $region24
        $region23: #{a_call__.1} parent=19 // pred_region
          %s139 = sand.u32 %s46, 1
          %s140 = scalar_lea.sflag [#allocation3], %s139
          %s141 = sand.u32 %s46, 1
          %s142 = smul.addr %s141, 256
          %s143 = scalar_lea.vmem [#allocation2], %s142
          %s144 = smul.u32 32, %s15
          %s146 = ssub.s32 4096, 4096
          %147 = vsyncadd %s140, %s146
          %s148 = smul.addr %s144, 128
          %s149 = scalar_lea.hbm %s1, %s148
          %s150 = sshll.u32 %s143, 4
          %s151 = int_to_ptr.vmem [resolvable:$true] %s150
          %156 = dma.hbm_to_vmem [thread:$0]  %s149, 4096, %s151, %s140, 128, 128, 8
        $region24: #{a_call__.1} parent=19 // pred_fallthru
          _
        // Predicated region
        $region25: #{a_call__.1} parent=19 // pred_check
          %p157 = pneg %p82
        $region26: #{a_call__.1} parent=19 // pred_check_branch
          %159 = sbr.rel (%p157) target = $region28
        $region27: #{a_call__.1} parent=19 // pred_region
          %s160 = sand.u32 %s72, 1
          %s161 = scalar_lea.sflag [#allocation5], %s160
          %s162 = sand.u32 %s72, 1
          %s163 = smul.addr %s162, 256
          %s164 = scalar_lea.vmem [#allocation4], %s163
          %s165 = smul.u32 32, %s15
          %s167 = ssub.s32 4096, 4096
          %168 = vsyncadd %s161, %s167
          %s169 = smul.addr %s165, 128
          %s170 = scalar_lea.hbm %s2, %s169
          %s171 = sshll.u32 %s164, 4
          %s172 = int_to_ptr.vmem [resolvable:$true] %s171
          %177 = dma.hbm_to_vmem [thread:$0]  %s170, 4096, %s172, %s161, 128, 128, 8
        $region28: #{a_call__.1} parent=19 // pred_fallthru
          _
      $region20: #{a_call__.1} parent=5 // pred_fallthru
        _
      %p178 = scmp.le.s32.totalorder 1, %s15
      %p179 = scmp.lt.s32.totalorder %s15, 9
      %p180 = pnand %p178, %p179
      %p181 = pneg %p180
      // Predicated region
      $region29: #{a_call__.1} parent=5 // pred_check
        _
      $region30: #{a_call__.1} parent=5 // pred_check_branch
        %183 = sbr.rel (%p180) target = $region32
      $region31: #{a_call__.1} parent=5 // pred_region
        %s184 = ssub.s32 %s15, 1
        %s185 = sand.u32 %s49, 1
        %s186 = scalar_lea.sflag [#allocation3], %s185
        %s187 = sand.u32 %s49, 1
        %s188 = smul.addr %s187, 256
        %s189 = scalar_lea.vmem [#allocation2], %s188
        // Predicated region
        $region33: #{a_call__.1} parent=31 // pred_check
          %p190 = pneg %p62
        $region34: #{a_call__.1} parent=31 // pred_check_branch
          %192 = sbr.rel (%p190) target = $region36
        $region35: #{a_call__.1} parent=31 // pred_region
          %193 = dma.done %s186, 4096
        $region36: #{a_call__.1} parent=31 // pred_fallthru
          _
        %s194 = sand.u32 %s75, 1
        %s195 = scalar_lea.sflag [#allocation5], %s194
        %s196 = sand.u32 %s75, 1
        %s197 = smul.addr %s196, 256
        %s198 = scalar_lea.vmem [#allocation4], %s197
        // Predicated region
        $region37: #{a_call__.1} parent=31 // pred_check
          %p199 = pneg %p88
        $region38: #{a_call__.1} parent=31 // pred_check_branch
          %201 = sbr.rel (%p199) target = $region40
        $region39: #{a_call__.1} parent=31 // pred_region
          %202 = dma.done %s195, 4096
        $region40: #{a_call__.1} parent=31 // pred_fallthru
          _
        %p203 = pneg %p36
        %p204 = pneg %p33
        %s205 = sand.u32 %s49, 1
        %s206 = scalar_lea.sflag [#allocation3], %s205
        %s207 = sand.u32 %s49, 1
        %s208 = smul.addr %s207, 256
        %s209 = scalar_lea.vmem [#allocation2], %s208
        %p210 = pneg %p62
        %p211 = pneg %p59
        %s212 = sand.u32 %s75, 1
        %s213 = scalar_lea.sflag [#allocation5], %s212
        %s214 = sand.u32 %s75, 1
        %s215 = smul.addr %s214, 256
        %s216 = scalar_lea.vmem [#allocation4], %s215
        %p217 = pneg %p88
        %p218 = pneg %p85
        %p219 = pneg %p114
        %p220 = pneg %p111
        %s221 = sand.u32 %s101, 1
        %s222 = sand.u32 %s101, 1
        %s223 = smul.addr %s222, 512
        %s224 = scalar_lea.vmem [#allocation6], %s223
        %s225 = smul.u32 32, %s20
        %s226 = smul.u32 32, %s20
        %s227 = smul.u32 32, %s20
        %v228 = vld [vmem:[%s0] sm:$0x3]
        %v229 = vld [vmem:[%s189] sm:$0xff]
        %v230 = vld [vmem:[%s189 + $0x8] sm:$0xff]
        %v231 = vld [vmem:[%s189 + $0x10] sm:$0xff]
        %v232 = vld [vmem:[%s189 + $0x18] sm:$0xff]
        %v233 = vld [vmem:[%s189 + $0x20] sm:$0xff]
        %v234 = vld [vmem:[%s189 + $0x28] sm:$0xff]
        %v235 = vld [vmem:[%s189 + $0x30] sm:$0xff]
        %v236 = vld [vmem:[%s189 + $0x38] sm:$0xff]
        %v237 = vld [vmem:[%s189 + $0x40] sm:$0xff]
        %v238 = vld [vmem:[%s189 + $0x48] sm:$0xff]
        %v239 = vld [vmem:[%s189 + $0x50] sm:$0xff]
        %v240 = vld [vmem:[%s189 + $0x58] sm:$0xff]
        %v241 = vld [vmem:[%s189 + $0x60] sm:$0xff]
        %v242 = vld [vmem:[%s189 + $0x68] sm:$0xff]
        %v243 = vld [vmem:[%s189 + $0x70] sm:$0xff]
        %v244 = vld [vmem:[%s189 + $0x78] sm:$0xff]
        %v245 = vld [vmem:[%s189 + $0x80] sm:$0xff]
        %v246 = vld [vmem:[%s189 + $0x88] sm:$0xff]
        %v247 = vld [vmem:[%s189 + $0x90] sm:$0xff]
        %v248 = vld [vmem:[%s189 + $0x98] sm:$0xff]
        %v249 = vld [vmem:[%s189 + $0xa0] sm:$0xff]
        %v250 = vld [vmem:[%s189 + $0xa8] sm:$0xff]
        %v251 = vld [vmem:[%s189 + $0xb0] sm:$0xff]
        %v252 = vld [vmem:[%s189 + $0xb8] sm:$0xff]
        %v253 = vld [vmem:[%s189 + $0xc0] sm:$0xff]
        %v254 = vld [vmem:[%s189 + $0xc8] sm:$0xff]
        %v255 = vld [vmem:[%s189 + $0xd0] sm:$0xff]
        %v256 = vld [vmem:[%s189 + $0xd8] sm:$0xff]
        %v257 = vld [vmem:[%s189 + $0xe0] sm:$0xff]
        %v258 = vld [vmem:[%s189 + $0xe8] sm:$0xff]
        %v259 = vld [vmem:[%s189 + $0xf0] sm:$0xff]
        %v260 = vld [vmem:[%s189 + $0xf8] sm:$0xff]
        %v261 = vld [vmem:[%s198] sm:$0xff]
        %v262 = vld [vmem:[%s198 + $0x8] sm:$0xff]
        %v263 = vld [vmem:[%s198 + $0x10] sm:$0xff]
        %v264 = vld [vmem:[%s198 + $0x18] sm:$0xff]
        %v265 = vld [vmem:[%s198 + $0x20] sm:$0xff]
        %v266 = vld [vmem:[%s198 + $0x28] sm:$0xff]
        %v267 = vld [vmem:[%s198 + $0x30] sm:$0xff]
        %v268 = vld [vmem:[%s198 + $0x38] sm:$0xff]
        %v269 = vld [vmem:[%s198 + $0x40] sm:$0xff]
        %v270 = vld [vmem:[%s198 + $0x48] sm:$0xff]
        %v271 = vld [vmem:[%s198 + $0x50] sm:$0xff]
        %v272 = vld [vmem:[%s198 + $0x58] sm:$0xff]
        %v273 = vld [vmem:[%s198 + $0x60] sm:$0xff]
        %v274 = vld [vmem:[%s198 + $0x68] sm:$0xff]
        %v275 = vld [vmem:[%s198 + $0x70] sm:$0xff]
        %v276 = vld [vmem:[%s198 + $0x78] sm:$0xff]
        %v277 = vld [vmem:[%s198 + $0x80] sm:$0xff]
        %v278 = vld [vmem:[%s198 + $0x88] sm:$0xff]
        %v279 = vld [vmem:[%s198 + $0x90] sm:$0xff]
        %v280 = vld [vmem:[%s198 + $0x98] sm:$0xff]
        %v281 = vld [vmem:[%s198 + $0xa0] sm:$0xff]
        %v282 = vld [vmem:[%s198 + $0xa8] sm:$0xff]
        %v283 = vld [vmem:[%s198 + $0xb0] sm:$0xff]
        %v284 = vld [vmem:[%s198 + $0xb8] sm:$0xff]
        %v285 = vld [vmem:[%s198 + $0xc0] sm:$0xff]
        %v286 = vld [vmem:[%s198 + $0xc8] sm:$0xff]
        %v287 = vld [vmem:[%s198 + $0xd0] sm:$0xff]
        %v288 = vld [vmem:[%s198 + $0xd8] sm:$0xff]
        %v289 = vld [vmem:[%s198 + $0xe0] sm:$0xff]
        %v290 = vld [vmem:[%s198 + $0xe8] sm:$0xff]
        %v291 = vld [vmem:[%s198 + $0xf0] sm:$0xff]
        %v292 = vld [vmem:[%s198 + $0xf8] sm:$0xff]
        %v295 = vunpack.c.l.s4 1966171168
        %v296 = vunpack.c.0.s8 %v295
        %v297 = vlaneseq
        %v298 = vshrl.u32 %v297, 7
        %v299 = vsub.s32 %v296, %v298
        %v300 = vrot.slane %v228, %v299
        %v301 = vcombine.high %v300, %v300
        %v303 = vunpack.c.l.s4 1966171168
        %v304 = vunpack.c.0.s8 %v303
        %v305 = vlaneseq
        %v306 = vshrl.u32 %v305, 7
        %v307 = vsub.s32 %v304, %v306
        %v308 = vrot.slane %v300, %v307
        %v310 = vunpack.c.l.s4 1966171168
        %v311 = vunpack.c.0.s8 %v310
        %v312 = vlaneseq
        %v313 = vshrl.u32 %v312, 7
        %v314 = vsub.s32 %v311, %v313
        %v315 = vrot.slane %v301, %v314
        %v316 = vlaneseq
        %v317 = vshrl.u32 %v316, 7
        %v318 = vsub.s32 0, %v317
        %v319 = vrot.slane %v308, %v318
        %v320 = vlaneseq
        %v321 = vshrl.u32 %v320, 7
        %v322 = vsub.s32 0, %v321
        %v323 = vrot.slane %v315, %v322
        %327 = vset.pattern.permute.xlu0 0
        %328 = vperm.xlu0 %327, %v229
        %v329 = vpop.permute.xlu0 %328
        %332 = vset.pattern.permute.xlu0 0
        %333 = vperm.xlu0 %332, %v230
        %v334 = vpop.permute.xlu0 %333
        %337 = vset.pattern.permute.xlu0 0
        %338 = vperm.xlu0 %337, %v231
        %v339 = vpop.permute.xlu0 %338
        %342 = vset.pattern.permute.xlu0 0
        %343 = vperm.xlu0 %342, %v232
        %v344 = vpop.permute.xlu0 %343
        %347 = vset.pattern.permute.xlu0 0
        %348 = vperm.xlu0 %347, %v233
        %v349 = vpop.permute.xlu0 %348
        %352 = vset.pattern.permute.xlu0 0
        %353 = vperm.xlu0 %352, %v234
        %v354 = vpop.permute.xlu0 %353
        %357 = vset.pattern.permute.xlu0 0
        %358 = vperm.xlu0 %357, %v235
        %v359 = vpop.permute.xlu0 %358
        %362 = vset.pattern.permute.xlu0 0
        %363 = vperm.xlu0 %362, %v236
        %v364 = vpop.permute.xlu0 %363
        %367 = vset.pattern.permute.xlu0 0
        %368 = vperm.xlu0 %367, %v237
        %v369 = vpop.permute.xlu0 %368
        %372 = vset.pattern.permute.xlu0 0
        %373 = vperm.xlu0 %372, %v238
        %v374 = vpop.permute.xlu0 %373
        %377 = vset.pattern.permute.xlu0 0
        %378 = vperm.xlu0 %377, %v239
        %v379 = vpop.permute.xlu0 %378
        %382 = vset.pattern.permute.xlu0 0
        %383 = vperm.xlu0 %382, %v240
        %v384 = vpop.permute.xlu0 %383
        %387 = vset.pattern.permute.xlu0 0
        %388 = vperm.xlu0 %387, %v241
        %v389 = vpop.permute.xlu0 %388
        %392 = vset.pattern.permute.xlu0 0
        %393 = vperm.xlu0 %392, %v242
        %v394 = vpop.permute.xlu0 %393
        %397 = vset.pattern.permute.xlu0 0
        %398 = vperm.xlu0 %397, %v243
        %v399 = vpop.permute.xlu0 %398
        %402 = vset.pattern.permute.xlu0 0
        %403 = vperm.xlu0 %402, %v244
        %v404 = vpop.permute.xlu0 %403
        %407 = vset.pattern.permute.xlu0 0
        %408 = vperm.xlu0 %407, %v245
        %v409 = vpop.permute.xlu0 %408
        %412 = vset.pattern.permute.xlu0 0
        %413 = vperm.xlu0 %412, %v246
        %v414 = vpop.permute.xlu0 %413
        %417 = vset.pattern.permute.xlu0 0
        %418 = vperm.xlu0 %417, %v247
        %v419 = vpop.permute.xlu0 %418
        %422 = vset.pattern.permute.xlu0 0
        %423 = vperm.xlu0 %422, %v248
        %v424 = vpop.permute.xlu0 %423
        %427 = vset.pattern.permute.xlu0 0
        %428 = vperm.xlu0 %427, %v249
        %v429 = vpop.permute.xlu0 %428
        %432 = vset.pattern.permute.xlu0 0
        %433 = vperm.xlu0 %432, %v250
        %v434 = vpop.permute.xlu0 %433
        %437 = vset.pattern.permute.xlu0 0
        %438 = vperm.xlu0 %437, %v251
        %v439 = vpop.permute.xlu0 %438
        %442 = vset.pattern.permute.xlu0 0
        %443 = vperm.xlu0 %442, %v252
        %v444 = vpop.permute.xlu0 %443
        %447 = vset.pattern.permute.xlu0 0
        %448 = vperm.xlu0 %447, %v253
        %v449 = vpop.permute.xlu0 %448
        %452 = vset.pattern.permute.xlu0 0
        %453 = vperm.xlu0 %452, %v254
        %v454 = vpop.permute.xlu0 %453
        %457 = vset.pattern.permute.xlu0 0
        %458 = vperm.xlu0 %457, %v255
        %v459 = vpop.permute.xlu0 %458
        %462 = vset.pattern.permute.xlu0 0
        %463 = vperm.xlu0 %462, %v256
        %v464 = vpop.permute.xlu0 %463
        %467 = vset.pattern.permute.xlu0 0
        %468 = vperm.xlu0 %467, %v257
        %v469 = vpop.permute.xlu0 %468
        %472 = vset.pattern.permute.xlu0 0
        %473 = vperm.xlu0 %472, %v258
        %v474 = vpop.permute.xlu0 %473
        %477 = vset.pattern.permute.xlu0 0
        %478 = vperm.xlu0 %477, %v259
        %v479 = vpop.permute.xlu0 %478
        %482 = vset.pattern.permute.xlu0 0
        %483 = vperm.xlu0 %482, %v260
        %v484 = vpop.permute.xlu0 %483
        %v486 = vmul.f32 %v319, %v329
        %v487 = vmul.f32 %v319, %v334
        %v488 = vmul.f32 %v319, %v339
        %v489 = vmul.f32 %v319, %v344
        %v490 = vmul.f32 %v319, %v349
        %v491 = vmul.f32 %v319, %v354
        %v492 = vmul.f32 %v319, %v359
        %v493 = vmul.f32 %v319, %v364
        %v494 = vmul.f32 %v319, %v369
        %v495 = vmul.f32 %v319, %v374
        %v496 = vmul.f32 %v319, %v379
        %v497 = vmul.f32 %v319, %v384
        %v498 = vmul.f32 %v319, %v389
        %v499 = vmul.f32 %v319, %v394
        %v500 = vmul.f32 %v319, %v399
        %v501 = vmul.f32 %v319, %v404
        %v502 = vmul.f32 %v319, %v409
        %v503 = vmul.f32 %v319, %v414
        %v504 = vmul.f32 %v319, %v419
        %v505 = vmul.f32 %v319, %v424
        %v506 = vmul.f32 %v319, %v429
        %v507 = vmul.f32 %v319, %v434
        %v508 = vmul.f32 %v319, %v439
        %v509 = vmul.f32 %v319, %v444
        %v510 = vmul.f32 %v319, %v449
        %v511 = vmul.f32 %v319, %v454
        %v512 = vmul.f32 %v319, %v459
        %v513 = vmul.f32 %v319, %v464
        %v514 = vmul.f32 %v319, %v469
        %v515 = vmul.f32 %v319, %v474
        %v516 = vmul.f32 %v319, %v479
        %v517 = vmul.f32 %v319, %v484
        %v518 = vmul.f32 %v323, %v329
        %v519 = vmul.f32 %v323, %v334
        %v520 = vmul.f32 %v323, %v339
        %v521 = vmul.f32 %v323, %v344
        %v522 = vmul.f32 %v323, %v349
        %v523 = vmul.f32 %v323, %v354
        %v524 = vmul.f32 %v323, %v359
        %v525 = vmul.f32 %v323, %v364
        %v526 = vmul.f32 %v323, %v369
        %v527 = vmul.f32 %v323, %v374
        %v528 = vmul.f32 %v323, %v379
        %v529 = vmul.f32 %v323, %v384
        %v530 = vmul.f32 %v323, %v389
        %v531 = vmul.f32 %v323, %v394
        %v532 = vmul.f32 %v323, %v399
        %v533 = vmul.f32 %v323, %v404
        %v534 = vmul.f32 %v323, %v409
        %v535 = vmul.f32 %v323, %v414
        %v536 = vmul.f32 %v323, %v419
        %v537 = vmul.f32 %v323, %v424
        %v538 = vmul.f32 %v323, %v429
        %v539 = vmul.f32 %v323, %v434
        %v540 = vmul.f32 %v323, %v439
        %v541 = vmul.f32 %v323, %v444
        %v542 = vmul.f32 %v323, %v449
        %v543 = vmul.f32 %v323, %v454
        %v544 = vmul.f32 %v323, %v459
        %v545 = vmul.f32 %v323, %v464
        %v546 = vmul.f32 %v323, %v469
        %v547 = vmul.f32 %v323, %v474
        %v548 = vmul.f32 %v323, %v479
        %v549 = vmul.f32 %v323, %v484
        %551 = vset.pattern.permute.xlu0 0
        %552 = vperm.xlu0 %551, %v261
        %v553 = vpop.permute.xlu0 %552
        %556 = vset.pattern.permute.xlu0 0
        %557 = vperm.xlu0 %556, %v262
        %v558 = vpop.permute.xlu0 %557
        %561 = vset.pattern.permute.xlu0 0
        %562 = vperm.xlu0 %561, %v263
        %v563 = vpop.permute.xlu0 %562
        %566 = vset.pattern.permute.xlu0 0
        %567 = vperm.xlu0 %566, %v264
        %v568 = vpop.permute.xlu0 %567
        %571 = vset.pattern.permute.xlu0 0
        %572 = vperm.xlu0 %571, %v265
        %v573 = vpop.permute.xlu0 %572
        %576 = vset.pattern.permute.xlu0 0
        %577 = vperm.xlu0 %576, %v266
        %v578 = vpop.permute.xlu0 %577
        %581 = vset.pattern.permute.xlu0 0
        %582 = vperm.xlu0 %581, %v267
        %v583 = vpop.permute.xlu0 %582
        %586 = vset.pattern.permute.xlu0 0
        %587 = vperm.xlu0 %586, %v268
        %v588 = vpop.permute.xlu0 %587
        %591 = vset.pattern.permute.xlu0 0
        %592 = vperm.xlu0 %591, %v269
        %v593 = vpop.permute.xlu0 %592
        %596 = vset.pattern.permute.xlu0 0
        %597 = vperm.xlu0 %596, %v270
        %v598 = vpop.permute.xlu0 %597
        %601 = vset.pattern.permute.xlu0 0
        %602 = vperm.xlu0 %601, %v271
        %v603 = vpop.permute.xlu0 %602
        %606 = vset.pattern.permute.xlu0 0
        %607 = vperm.xlu0 %606, %v272
        %v608 = vpop.permute.xlu0 %607
        %611 = vset.pattern.permute.xlu0 0
        %612 = vperm.xlu0 %611, %v273
        %v613 = vpop.permute.xlu0 %612
        %616 = vset.pattern.permute.xlu0 0
        %617 = vperm.xlu0 %616, %v274
        %v618 = vpop.permute.xlu0 %617
        %621 = vset.pattern.permute.xlu0 0
        %622 = vperm.xlu0 %621, %v275
        %v623 = vpop.permute.xlu0 %622
        %626 = vset.pattern.permute.xlu0 0
        %627 = vperm.xlu0 %626, %v276
        %v628 = vpop.permute.xlu0 %627
        %631 = vset.pattern.permute.xlu0 0
        %632 = vperm.xlu0 %631, %v277
        %v633 = vpop.permute.xlu0 %632
        %636 = vset.pattern.permute.xlu0 0
        %637 = vperm.xlu0 %636, %v278
        %v638 = vpop.permute.xlu0 %637
        %641 = vset.pattern.permute.xlu0 0
        %642 = vperm.xlu0 %641, %v279
        %v643 = vpop.permute.xlu0 %642
        %646 = vset.pattern.permute.xlu0 0
        %647 = vperm.xlu0 %646, %v280
        %v648 = vpop.permute.xlu0 %647
        %651 = vset.pattern.permute.xlu0 0
        %652 = vperm.xlu0 %651, %v281
        %v653 = vpop.permute.xlu0 %652
        %656 = vset.pattern.permute.xlu0 0
        %657 = vperm.xlu0 %656, %v282
        %v658 = vpop.permute.xlu0 %657
        %661 = vset.pattern.permute.xlu0 0
        %662 = vperm.xlu0 %661, %v283
        %v663 = vpop.permute.xlu0 %662
        %666 = vset.pattern.permute.xlu0 0
        %667 = vperm.xlu0 %666, %v284
        %v668 = vpop.permute.xlu0 %667
        %671 = vset.pattern.permute.xlu0 0
        %672 = vperm.xlu0 %671, %v285
        %v673 = vpop.permute.xlu0 %672
        %676 = vset.pattern.permute.xlu0 0
        %677 = vperm.xlu0 %676, %v286
        %v678 = vpop.permute.xlu0 %677
        %681 = vset.pattern.permute.xlu0 0
        %682 = vperm.xlu0 %681, %v287
        %v683 = vpop.permute.xlu0 %682
        %686 = vset.pattern.permute.xlu0 0
        %687 = vperm.xlu0 %686, %v288
        %v688 = vpop.permute.xlu0 %687
        %691 = vset.pattern.permute.xlu0 0
        %692 = vperm.xlu0 %691, %v289
        %v693 = vpop.permute.xlu0 %692
        %696 = vset.pattern.permute.xlu0 0
        %697 = vperm.xlu0 %696, %v290
        %v698 = vpop.permute.xlu0 %697
        %701 = vset.pattern.permute.xlu0 0
        %702 = vperm.xlu0 %701, %v291
        %v703 = vpop.permute.xlu0 %702
        %706 = vset.pattern.permute.xlu0 0
        %707 = vperm.xlu0 %706, %v292
        %v708 = vpop.permute.xlu0 %707
        %v710 = vadd.f32 %v486, %v553
        %v711 = vadd.f32 %v487, %v558
        %v712 = vadd.f32 %v488, %v563
        %v713 = vadd.f32 %v489, %v568
        %v714 = vadd.f32 %v490, %v573
        %v715 = vadd.f32 %v491, %v578
        %v716 = vadd.f32 %v492, %v583
        %v717 = vadd.f32 %v493, %v588
        %v718 = vadd.f32 %v494, %v593
        %v719 = vadd.f32 %v495, %v598
        %v720 = vadd.f32 %v496, %v603
        %v721 = vadd.f32 %v497, %v608
        %v722 = vadd.f32 %v498, %v613
        %v723 = vadd.f32 %v499, %v618
        %v724 = vadd.f32 %v500, %v623
        %v725 = vadd.f32 %v501, %v628
        %v726 = vadd.f32 %v502, %v633
        %v727 = vadd.f32 %v503, %v638
        %v728 = vadd.f32 %v504, %v643
        %v729 = vadd.f32 %v505, %v648
        %v730 = vadd.f32 %v506, %v653
        %v731 = vadd.f32 %v507, %v658
        %v732 = vadd.f32 %v508, %v663
        %v733 = vadd.f32 %v509, %v668
        %v734 = vadd.f32 %v510, %v673
        %v735 = vadd.f32 %v511, %v678
        %v736 = vadd.f32 %v512, %v683
        %v737 = vadd.f32 %v513, %v688
        %v738 = vadd.f32 %v514, %v693
        %v739 = vadd.f32 %v515, %v698
        %v740 = vadd.f32 %v516, %v703
        %v741 = vadd.f32 %v517, %v708
        %v742 = vadd.f32 %v518, %v553
        %v743 = vadd.f32 %v519, %v558
        %v744 = vadd.f32 %v520, %v563
        %v745 = vadd.f32 %v521, %v568
        %v746 = vadd.f32 %v522, %v573
        %v747 = vadd.f32 %v523, %v578
        %v748 = vadd.f32 %v524, %v583
        %v749 = vadd.f32 %v525, %v588
        %v750 = vadd.f32 %v526, %v593
        %v751 = vadd.f32 %v527, %v598
        %v752 = vadd.f32 %v528, %v603
        %v753 = vadd.f32 %v529, %v608
        %v754 = vadd.f32 %v530, %v613
        %v755 = vadd.f32 %v531, %v618
        %v756 = vadd.f32 %v532, %v623
        %v757 = vadd.f32 %v533, %v628
        %v758 = vadd.f32 %v534, %v633
        %v759 = vadd.f32 %v535, %v638
        %v760 = vadd.f32 %v536, %v643
        %v761 = vadd.f32 %v537, %v648
        %v762 = vadd.f32 %v538, %v653
        %v763 = vadd.f32 %v539, %v658
        %v764 = vadd.f32 %v540, %v663
        %v765 = vadd.f32 %v541, %v668
        %v766 = vadd.f32 %v542, %v673
        %v767 = vadd.f32 %v543, %v678
        %v768 = vadd.f32 %v544, %v683
        %v769 = vadd.f32 %v545, %v688
        %v770 = vadd.f32 %v546, %v693
        %v771 = vadd.f32 %v547, %v698
        %v772 = vadd.f32 %v548, %v703
        %v773 = vadd.f32 %v549, %v708
        %vm774 = vcmask 523264
        %775 = vst.msk [vmem:[%s224] sm:$0xff] %vm774, %v710
        %776 = vst.msk [vmem:[%s224 + $0x8] sm:$0xff] %vm774, %v711
        %777 = vst.msk [vmem:[%s224 + $0x10] sm:$0xff] %vm774, %v712
        %778 = vst.msk [vmem:[%s224 + $0x18] sm:$0xff] %vm774, %v713
        %779 = vst.msk [vmem:[%s224 + $0x20] sm:$0xff] %vm774, %v714
        %780 = vst.msk [vmem:[%s224 + $0x28] sm:$0xff] %vm774, %v715
        %781 = vst.msk [vmem:[%s224 + $0x30] sm:$0xff] %vm774, %v716
        %782 = vst.msk [vmem:[%s224 + $0x38] sm:$0xff] %vm774, %v717
        %783 = vst.msk [vmem:[%s224 + $0x40] sm:$0xff] %vm774, %v718
        %784 = vst.msk [vmem:[%s224 + $0x48] sm:$0xff] %vm774, %v719
        %785 = vst.msk [vmem:[%s224 + $0x50] sm:$0xff] %vm774, %v720
        %786 = vst.msk [vmem:[%s224 + $0x58] sm:$0xff] %vm774, %v721
        %787 = vst.msk [vmem:[%s224 + $0x60] sm:$0xff] %vm774, %v722
        %788 = vst.msk [vmem:[%s224 + $0x68] sm:$0xff] %vm774, %v723
        %789 = vst.msk [vmem:[%s224 + $0x70] sm:$0xff] %vm774, %v724
        %790 = vst.msk [vmem:[%s224 + $0x78] sm:$0xff] %vm774, %v725
        %791 = vst.msk [vmem:[%s224 + $0x80] sm:$0xff] %vm774, %v726
        %792 = vst.msk [vmem:[%s224 + $0x88] sm:$0xff] %vm774, %v727
        %793 = vst.msk [vmem:[%s224 + $0x90] sm:$0xff] %vm774, %v728
        %794 = vst.msk [vmem:[%s224 + $0x98] sm:$0xff] %vm774, %v729
        %795 = vst.msk [vmem:[%s224 + $0xa0] sm:$0xff] %vm774, %v730
        %796 = vst.msk [vmem:[%s224 + $0xa8] sm:$0xff] %vm774, %v731
        %797 = vst.msk [vmem:[%s224 + $0xb0] sm:$0xff] %vm774, %v732
        %798 = vst.msk [vmem:[%s224 + $0xb8] sm:$0xff] %vm774, %v733
        %799 = vst.msk [vmem:[%s224 + $0xc0] sm:$0xff] %vm774, %v734
        %800 = vst.msk [vmem:[%s224 + $0xc8] sm:$0xff] %vm774, %v735
        %801 = vst.msk [vmem:[%s224 + $0xd0] sm:$0xff] %vm774, %v736
        %802 = vst.msk [vmem:[%s224 + $0xd8] sm:$0xff] %vm774, %v737
        %803 = vst.msk [vmem:[%s224 + $0xe0] sm:$0xff] %vm774, %v738
        %804 = vst.msk [vmem:[%s224 + $0xe8] sm:$0xff] %vm774, %v739
        %805 = vst.msk [vmem:[%s224 + $0xf0] sm:$0xff] %vm774, %v740
        %806 = vst.msk [vmem:[%s224 + $0xf8] sm:$0xff] %vm774, %v741
        %807 = vst.msk [vmem:[%s224 + $0x100] sm:$0xff] %vm774, %v742
        %808 = vst.msk [vmem:[%s224 + $0x108] sm:$0xff] %vm774, %v743
        %809 = vst.msk [vmem:[%s224 + $0x110] sm:$0xff] %vm774, %v744
        %810 = vst.msk [vmem:[%s224 + $0x118] sm:$0xff] %vm774, %v745
        %811 = vst.msk [vmem:[%s224 + $0x120] sm:$0xff] %vm774, %v746
        %812 = vst.msk [vmem:[%s224 + $0x128] sm:$0xff] %vm774, %v747
        %813 = vst.msk [vmem:[%s224 + $0x130] sm:$0xff] %vm774, %v748
        %814 = vst.msk [vmem:[%s224 + $0x138] sm:$0xff] %vm774, %v749
        %815 = vst.msk [vmem:[%s224 + $0x140] sm:$0xff] %vm774, %v750
        %816 = vst.msk [vmem:[%s224 + $0x148] sm:$0xff] %vm774, %v751
        %817 = vst.msk [vmem:[%s224 + $0x150] sm:$0xff] %vm774, %v752
        %818 = vst.msk [vmem:[%s224 + $0x158] sm:$0xff] %vm774, %v753
        %819 = vst.msk [vmem:[%s224 + $0x160] sm:$0xff] %vm774, %v754
        %820 = vst.msk [vmem:[%s224 + $0x168] sm:$0xff] %vm774, %v755
        %821 = vst.msk [vmem:[%s224 + $0x170] sm:$0xff] %vm774, %v756
        %822 = vst.msk [vmem:[%s224 + $0x178] sm:$0xff] %vm774, %v757
        %823 = vst.msk [vmem:[%s224 + $0x180] sm:$0xff] %vm774, %v758
        %824 = vst.msk [vmem:[%s224 + $0x188] sm:$0xff] %vm774, %v759
        %825 = vst.msk [vmem:[%s224 + $0x190] sm:$0xff] %vm774, %v760
        %826 = vst.msk [vmem:[%s224 + $0x198] sm:$0xff] %vm774, %v761
        %827 = vst.msk [vmem:[%s224 + $0x1a0] sm:$0xff] %vm774, %v762
        %828 = vst.msk [vmem:[%s224 + $0x1a8] sm:$0xff] %vm774, %v763
        %829 = vst.msk [vmem:[%s224 + $0x1b0] sm:$0xff] %vm774, %v764
        %830 = vst.msk [vmem:[%s224 + $0x1b8] sm:$0xff] %vm774, %v765
        %831 = vst.msk [vmem:[%s224 + $0x1c0] sm:$0xff] %vm774, %v766
        %832 = vst.msk [vmem:[%s224 + $0x1c8] sm:$0xff] %vm774, %v767
        %833 = vst.msk [vmem:[%s224 + $0x1d0] sm:$0xff] %vm774, %v768
        %834 = vst.msk [vmem:[%s224 + $0x1d8] sm:$0xff] %vm774, %v769
        %835 = vst.msk [vmem:[%s224 + $0x1e0] sm:$0xff] %vm774, %v770
        %836 = vst.msk [vmem:[%s224 + $0x1e8] sm:$0xff] %vm774, %v771
        %837 = vst.msk [vmem:[%s224 + $0x1f0] sm:$0xff] %vm774, %v772
        %838 = vst.msk [vmem:[%s224 + $0x1f8] sm:$0xff] %vm774, %v773
        %s839 = sand.u32 %s101, 1
        %s840 = sand.u32 %s101, 1
        %s841 = smul.addr %s840, 512
        %s842 = scalar_lea.vmem [#allocation6], %s841
        // Predicated region
        $region41: #{a_call__.1} parent=31 // pred_check
          %p843 = pneg %p111
        $region42: #{a_call__.1} parent=31 // pred_check_branch
          %845 = sbr.rel (%p843) target = $region44
        $region43: #{a_call__.1} parent=31 // pred_region
          %s846 = smul.u32 32, %s20
          %s847 = smul.addr %s846, 8
          %s848 = scalar_lea.vmem %s3, %s847
          // Predicated region
          $region45: #{a_call__.1} parent=43 // pred_check
            _
          $region46: #{a_call__.1} parent=43 // pred_check_branch
            %850 = sbr.rel (0) target = $region48
          $region47: #{a_call__.1} parent=43 // pred_region
            // Predicated region
            $region49: #{a_call__.1} parent=47 // pred_check
              _
            $region50: #{a_call__.1} parent=47 // pred_check_branch
              %852 = sbr.rel (0) target = $region52
            $region51: #{a_call__.1} parent=47 // pred_region
              // Predicated region
              $region64: #{a_call__.1} parent=51 // pred_check
                _
              $region65: #{a_call__.1} parent=51 // pred_check_branch
                %993 = sbr.rel (0) target = $region67
              $region66: #{a_call__.1} parent=51 // pred_region
                loop: start=0, step=1, limit=1
                $region68: #{a_call__.1} parent=66 // loop_pre_header
                  _
                $region69: #{a_call__.1} parent=66 // loop_header
                  %s995 = sphi 0, %s999
                  %p996 = scmp.ge.s32.totalorder %s995, 1
                  %s1000 = sphi %s842, %s842
                  %s1001 = sphi %s848, %s848
                $region70: #{a_call__.1} parent=66 // loop_header_branch
                  %998 = sbr.rel (%p996) target = $region74
                $region71: #{a_call__.1} parent=66 // loop_body
                  %v1002 = vld [vmem:[%s1000] sm:$0xff]
                  %1003 = vst [vmem:[%s1001] sm:$0xff] %v1002
                  %v1004 = vld [vmem:[%s1000 + $0x8] sm:$0xff]
                  %1005 = vst [vmem:[%s1001 + $0x8] sm:$0xff] %v1004
                  %v1006 = vld [vmem:[%s1000 + $0x10] sm:$0xff]
                  %1007 = vst [vmem:[%s1001 + $0x10] sm:$0xff] %v1006
                  %v1008 = vld [vmem:[%s1000 + $0x18] sm:$0xff]
                  %1009 = vst [vmem:[%s1001 + $0x18] sm:$0xff] %v1008
                  %v1010 = vld [vmem:[%s1000 + $0x20] sm:$0xff]
                  %1011 = vst [vmem:[%s1001 + $0x20] sm:$0xff] %v1010
                  %v1012 = vld [vmem:[%s1000 + $0x28] sm:$0xff]
                  %1013 = vst [vmem:[%s1001 + $0x28] sm:$0xff] %v1012
                  %v1014 = vld [vmem:[%s1000 + $0x30] sm:$0xff]
                  %1015 = vst [vmem:[%s1001 + $0x30] sm:$0xff] %v1014
                  %v1016 = vld [vmem:[%s1000 + $0x38] sm:$0xff]
                  %1017 = vst [vmem:[%s1001 + $0x38] sm:$0xff] %v1016
                  %v1018 = vld [vmem:[%s1000 + $0x40] sm:$0xff]
                  %1019 = vst [vmem:[%s1001 + $0x40] sm:$0xff] %v1018
                  %v1020 = vld [vmem:[%s1000 + $0x48] sm:$0xff]
                  %1021 = vst [vmem:[%s1001 + $0x48] sm:$0xff] %v1020
                  %v1022 = vld [vmem:[%s1000 + $0x50] sm:$0xff]
                  %1023 = vst [vmem:[%s1001 + $0x50] sm:$0xff] %v1022
                  %v1024 = vld [vmem:[%s1000 + $0x58] sm:$0xff]
                  %1025 = vst [vmem:[%s1001 + $0x58] sm:$0xff] %v1024
                  %v1026 = vld [vmem:[%s1000 + $0x60] sm:$0xff]
                  %1027 = vst [vmem:[%s1001 + $0x60] sm:$0xff] %v1026
                  %v1028 = vld [vmem:[%s1000 + $0x68] sm:$0xff]
                  %1029 = vst [vmem:[%s1001 + $0x68] sm:$0xff] %v1028
                  %v1030 = vld [vmem:[%s1000 + $0x70] sm:$0xff]
                  %1031 = vst [vmem:[%s1001 + $0x70] sm:$0xff] %v1030
                  %v1032 = vld [vmem:[%s1000 + $0x78] sm:$0xff]
                  %1033 = vst [vmem:[%s1001 + $0x78] sm:$0xff] %v1032
                  %v1034 = vld [vmem:[%s1000 + $0x80] sm:$0xff]
                  %1035 = vst [vmem:[%s1001 + $0x80] sm:$0xff] %v1034
                  %v1036 = vld [vmem:[%s1000 + $0x88] sm:$0xff]
                  %1037 = vst [vmem:[%s1001 + $0x88] sm:$0xff] %v1036
                  %v1038 = vld [vmem:[%s1000 + $0x90] sm:$0xff]
                  %1039 = vst [vmem:[%s1001 + $0x90] sm:$0xff] %v1038
                  %v1040 = vld [vmem:[%s1000 + $0x98] sm:$0xff]
                  %1041 = vst [vmem:[%s1001 + $0x98] sm:$0xff] %v1040
                  %v1042 = vld [vmem:[%s1000 + $0xa0] sm:$0xff]
                  %1043 = vst [vmem:[%s1001 + $0xa0] sm:$0xff] %v1042
                  %v1044 = vld [vmem:[%s1000 + $0xa8] sm:$0xff]
                  %1045 = vst [vmem:[%s1001 + $0xa8] sm:$0xff] %v1044
                  %v1046 = vld [vmem:[%s1000 + $0xb0] sm:$0xff]
                  %1047 = vst [vmem:[%s1001 + $0xb0] sm:$0xff] %v1046
                  %v1048 = vld [vmem:[%s1000 + $0xb8] sm:$0xff]
                  %1049 = vst [vmem:[%s1001 + $0xb8] sm:$0xff] %v1048
                  %v1050 = vld [vmem:[%s1000 + $0xc0] sm:$0xff]
                  %1051 = vst [vmem:[%s1001 + $0xc0] sm:$0xff] %v1050
                  %v1052 = vld [vmem:[%s1000 + $0xc8] sm:$0xff]
                  %1053 = vst [vmem:[%s1001 + $0xc8] sm:$0xff] %v1052
                  %v1054 = vld [vmem:[%s1000 + $0xd0] sm:$0xff]
                  %1055 = vst [vmem:[%s1001 + $0xd0] sm:$0xff] %v1054
                  %v1056 = vld [vmem:[%s1000 + $0xd8] sm:$0xff]
                  %1057 = vst [vmem:[%s1001 + $0xd8] sm:$0xff] %v1056
                  %v1058 = vld [vmem:[%s1000 + $0xe0] sm:$0xff]
                  %1059 = vst [vmem:[%s1001 + $0xe0] sm:$0xff] %v1058
                  %v1060 = vld [vmem:[%s1000 + $0xe8] sm:$0xff]
                  %1061 = vst [vmem:[%s1001 + $0xe8] sm:$0xff] %v1060
                  %v1062 = vld [vmem:[%s1000 + $0xf0] sm:$0xff]
                  %1063 = vst [vmem:[%s1001 + $0xf0] sm:$0xff] %v1062
                  %v1064 = vld [vmem:[%s1000 + $0xf8] sm:$0xff]
                  %1065 = vst [vmem:[%s1001 + $0xf8] sm:$0xff] %v1064
                  %v1066 = vld [vmem:[%s1000 + $0x100] sm:$0xff]
                  %1067 = vst [vmem:[%s1001 + $0x800] sm:$0xff] %v1066
                  %v1068 = vld [vmem:[%s1000 + $0x108] sm:$0xff]
                  %1069 = vst [vmem:[%s1001 + $0x808] sm:$0xff] %v1068
                  %v1070 = vld [vmem:[%s1000 + $0x110] sm:$0xff]
                  %1071 = vst [vmem:[%s1001 + $0x810] sm:$0xff] %v1070
                  %v1072 = vld [vmem:[%s1000 + $0x118] sm:$0xff]
                  %1073 = vst [vmem:[%s1001 + $0x818] sm:$0xff] %v1072
                  %v1074 = vld [vmem:[%s1000 + $0x120] sm:$0xff]
                  %1075 = vst [vmem:[%s1001 + $0x820] sm:$0xff] %v1074
                  %v1076 = vld [vmem:[%s1000 + $0x128] sm:$0xff]
                  %1077 = vst [vmem:[%s1001 + $0x828] sm:$0xff] %v1076
                  %v1078 = vld [vmem:[%s1000 + $0x130] sm:$0xff]
                  %1079 = vst [vmem:[%s1001 + $0x830] sm:$0xff] %v1078
                  %v1080 = vld [vmem:[%s1000 + $0x138] sm:$0xff]
                  %1081 = vst [vmem:[%s1001 + $0x838] sm:$0xff] %v1080
                  %v1082 = vld [vmem:[%s1000 + $0x140] sm:$0xff]
                  %1083 = vst [vmem:[%s1001 + $0x840] sm:$0xff] %v1082
                  %v1084 = vld [vmem:[%s1000 + $0x148] sm:$0xff]
                  %1085 = vst [vmem:[%s1001 + $0x848] sm:$0xff] %v1084
                  %v1086 = vld [vmem:[%s1000 + $0x150] sm:$0xff]
                  %1087 = vst [vmem:[%s1001 + $0x850] sm:$0xff] %v1086
                  %v1088 = vld [vmem:[%s1000 + $0x158] sm:$0xff]
                  %1089 = vst [vmem:[%s1001 + $0x858] sm:$0xff] %v1088
                  %v1090 = vld [vmem:[%s1000 + $0x160] sm:$0xff]
                  %1091 = vst [vmem:[%s1001 + $0x860] sm:$0xff] %v1090
                  %v1092 = vld [vmem:[%s1000 + $0x168] sm:$0xff]
                  %1093 = vst [vmem:[%s1001 + $0x868] sm:$0xff] %v1092
                  %v1094 = vld [vmem:[%s1000 + $0x170] sm:$0xff]
                  %1095 = vst [vmem:[%s1001 + $0x870] sm:$0xff] %v1094
                  %v1096 = vld [vmem:[%s1000 + $0x178] sm:$0xff]
                  %1097 = vst [vmem:[%s1001 + $0x878] sm:$0xff] %v1096
                  %v1098 = vld [vmem:[%s1000 + $0x180] sm:$0xff]
                  %1099 = vst [vmem:[%s1001 + $0x880] sm:$0xff] %v1098
                  %v1100 = vld [vmem:[%s1000 + $0x188] sm:$0xff]
                  %1101 = vst [vmem:[%s1001 + $0x888] sm:$0xff] %v1100
                  %v1102 = vld [vmem:[%s1000 + $0x190] sm:$0xff]
                  %1103 = vst [vmem:[%s1001 + $0x890] sm:$0xff] %v1102
                  %v1104 = vld [vmem:[%s1000 + $0x198] sm:$0xff]
                  %1105 = vst [vmem:[%s1001 + $0x898] sm:$0xff] %v1104
                  %v1106 = vld [vmem:[%s1000 + $0x1a0] sm:$0xff]
                  %1107 = vst [vmem:[%s1001 + $0x8a0] sm:$0xff] %v1106
                  %v1108 = vld [vmem:[%s1000 + $0x1a8] sm:$0xff]
                  %1109 = vst [vmem:[%s1001 + $0x8a8] sm:$0xff] %v1108
                  %v1110 = vld [vmem:[%s1000 + $0x1b0] sm:$0xff]
                  %1111 = vst [vmem:[%s1001 + $0x8b0] sm:$0xff] %v1110
                  %v1112 = vld [vmem:[%s1000 + $0x1b8] sm:$0xff]
                  %1113 = vst [vmem:[%s1001 + $0x8b8] sm:$0xff] %v1112
                  %v1114 = vld [vmem:[%s1000 + $0x1c0] sm:$0xff]
                  %1115 = vst [vmem:[%s1001 + $0x8c0] sm:$0xff] %v1114
                  %v1116 = vld [vmem:[%s1000 + $0x1c8] sm:$0xff]
                  %1117 = vst [vmem:[%s1001 + $0x8c8] sm:$0xff] %v1116
                  %v1118 = vld [vmem:[%s1000 + $0x1d0] sm:$0xff]
                  %1119 = vst [vmem:[%s1001 + $0x8d0] sm:$0xff] %v1118
                  %v1120 = vld [vmem:[%s1000 + $0x1d8] sm:$0xff]
                  %1121 = vst [vmem:[%s1001 + $0x8d8] sm:$0xff] %v1120
                  %v1122 = vld [vmem:[%s1000 + $0x1e0] sm:$0xff]
                  %1123 = vst [vmem:[%s1001 + $0x8e0] sm:$0xff] %v1122
                  %v1124 = vld [vmem:[%s1000 + $0x1e8] sm:$0xff]
                  %1125 = vst [vmem:[%s1001 + $0x8e8] sm:$0xff] %v1124
                  %v1126 = vld [vmem:[%s1000 + $0x1f0] sm:$0xff]
                  %1127 = vst [vmem:[%s1001 + $0x8f0] sm:$0xff] %v1126
                  %v1128 = vld [vmem:[%s1000 + $0x1f8] sm:$0xff]
                  %1129 = vst [vmem:[%s1001 + $0x8f8] sm:$0xff] %v1128
                $region72: #{a_call__.1} parent=66 // loop_footer
                  %s999 = sadd.s32 1, %s995
                $region73: #{a_call__.1} parent=66 // loop_footer_branch
                  %994 = sbr.rel target = $region69
                $region74: #{a_call__.1} parent=66 // loop_exit
                  _
              $region67: #{a_call__.1} parent=51 // pred_fallthru
                _
              // Predicated region
              $region75: #{a_call__.1} parent=51 // pred_check
                _
              $region76: #{a_call__.1} parent=51 // pred_check_branch
                %1131 = sbr.rel target = $region78
              $region77: #{a_call__.1} parent=51 // pred_region
                _
              $region78: #{a_call__.1} parent=51 // pred_fallthru
                _
            $region52: #{a_call__.1} parent=47 // pred_fallthru
              _
            // Predicated region
            $region53: #{a_call__.1} parent=47 // pred_check
              _
            $region54: #{a_call__.1} parent=47 // pred_check_branch
              %854 = sbr.rel target = $region56
            $region55: #{a_call__.1} parent=47 // pred_region
              loop: start=0, step=1, limit=1
              $region57: #{a_call__.1} parent=55 // loop_pre_header
                _
              $region58: #{a_call__.1} parent=55 // loop_header
                %s857 = sphi 0, %s861
                %p858 = scmp.ge.s32.totalorder %s857, 1
                %s862 = sphi %s842, %s842
                %s863 = sphi %s848, %s848
              $region59: #{a_call__.1} parent=55 // loop_header_branch
                %860 = sbr.rel (%p858) target = $region63
              $region60: #{a_call__.1} parent=55 // loop_body
                %v864 = vld [vmem:[%s862] sm:$0xff]
                %865 = vst [vmem:[%s863] sm:$0xff] %v864
                %v866 = vld [vmem:[%s862 + $0x8] sm:$0xff]
                %867 = vst [vmem:[%s863 + $0x8] sm:$0xff] %v866
                %v868 = vld [vmem:[%s862 + $0x10] sm:$0xff]
                %869 = vst [vmem:[%s863 + $0x10] sm:$0xff] %v868
                %v870 = vld [vmem:[%s862 + $0x18] sm:$0xff]
                %871 = vst [vmem:[%s863 + $0x18] sm:$0xff] %v870
                %v872 = vld [vmem:[%s862 + $0x20] sm:$0xff]
                %873 = vst [vmem:[%s863 + $0x20] sm:$0xff] %v872
                %v874 = vld [vmem:[%s862 + $0x28] sm:$0xff]
                %875 = vst [vmem:[%s863 + $0x28] sm:$0xff] %v874
                %v876 = vld [vmem:[%s862 + $0x30] sm:$0xff]
                %877 = vst [vmem:[%s863 + $0x30] sm:$0xff] %v876
                %v878 = vld [vmem:[%s862 + $0x38] sm:$0xff]
                %879 = vst [vmem:[%s863 + $0x38] sm:$0xff] %v878
                %v880 = vld [vmem:[%s862 + $0x40] sm:$0xff]
                %881 = vst [vmem:[%s863 + $0x40] sm:$0xff] %v880
                %v882 = vld [vmem:[%s862 + $0x48] sm:$0xff]
                %883 = vst [vmem:[%s863 + $0x48] sm:$0xff] %v882
                %v884 = vld [vmem:[%s862 + $0x50] sm:$0xff]
                %885 = vst [vmem:[%s863 + $0x50] sm:$0xff] %v884
                %v886 = vld [vmem:[%s862 + $0x58] sm:$0xff]
                %887 = vst [vmem:[%s863 + $0x58] sm:$0xff] %v886
                %v888 = vld [vmem:[%s862 + $0x60] sm:$0xff]
                %889 = vst [vmem:[%s863 + $0x60] sm:$0xff] %v888
                %v890 = vld [vmem:[%s862 + $0x68] sm:$0xff]
                %891 = vst [vmem:[%s863 + $0x68] sm:$0xff] %v890
                %v892 = vld [vmem:[%s862 + $0x70] sm:$0xff]
                %893 = vst [vmem:[%s863 + $0x70] sm:$0xff] %v892
                %v894 = vld [vmem:[%s862 + $0x78] sm:$0xff]
                %895 = vst [vmem:[%s863 + $0x78] sm:$0xff] %v894
                %v896 = vld [vmem:[%s862 + $0x80] sm:$0xff]
                %897 = vst [vmem:[%s863 + $0x80] sm:$0xff] %v896
                %v898 = vld [vmem:[%s862 + $0x88] sm:$0xff]
                %899 = vst [vmem:[%s863 + $0x88] sm:$0xff] %v898
                %v900 = vld [vmem:[%s862 + $0x90] sm:$0xff]
                %901 = vst [vmem:[%s863 + $0x90] sm:$0xff] %v900
                %v902 = vld [vmem:[%s862 + $0x98] sm:$0xff]
                %903 = vst [vmem:[%s863 + $0x98] sm:$0xff] %v902
                %v904 = vld [vmem:[%s862 + $0xa0] sm:$0xff]
                %905 = vst [vmem:[%s863 + $0xa0] sm:$0xff] %v904
                %v906 = vld [vmem:[%s862 + $0xa8] sm:$0xff]
                %907 = vst [vmem:[%s863 + $0xa8] sm:$0xff] %v906
                %v908 = vld [vmem:[%s862 + $0xb0] sm:$0xff]
                %909 = vst [vmem:[%s863 + $0xb0] sm:$0xff] %v908
                %v910 = vld [vmem:[%s862 + $0xb8] sm:$0xff]
                %911 = vst [vmem:[%s863 + $0xb8] sm:$0xff] %v910
                %v912 = vld [vmem:[%s862 + $0xc0] sm:$0xff]
                %913 = vst [vmem:[%s863 + $0xc0] sm:$0xff] %v912
                %v914 = vld [vmem:[%s862 + $0xc8] sm:$0xff]
                %915 = vst [vmem:[%s863 + $0xc8] sm:$0xff] %v914
                %v916 = vld [vmem:[%s862 + $0xd0] sm:$0xff]
                %917 = vst [vmem:[%s863 + $0xd0] sm:$0xff] %v916
                %v918 = vld [vmem:[%s862 + $0xd8] sm:$0xff]
                %919 = vst [vmem:[%s863 + $0xd8] sm:$0xff] %v918
                %v920 = vld [vmem:[%s862 + $0xe0] sm:$0xff]
                %921 = vst [vmem:[%s863 + $0xe0] sm:$0xff] %v920
                %v922 = vld [vmem:[%s862 + $0xe8] sm:$0xff]
                %923 = vst [vmem:[%s863 + $0xe8] sm:$0xff] %v922
                %v924 = vld [vmem:[%s862 + $0xf0] sm:$0xff]
                %925 = vst [vmem:[%s863 + $0xf0] sm:$0xff] %v924
                %v926 = vld [vmem:[%s862 + $0xf8] sm:$0xff]
                %927 = vst [vmem:[%s863 + $0xf8] sm:$0xff] %v926
                %v928 = vld [vmem:[%s862 + $0x100] sm:$0xff]
                %929 = vst [vmem:[%s863 + $0x800] sm:$0xff] %v928
                %v930 = vld [vmem:[%s862 + $0x108] sm:$0xff]
                %931 = vst [vmem:[%s863 + $0x808] sm:$0xff] %v930
                %v932 = vld [vmem:[%s862 + $0x110] sm:$0xff]
                %933 = vst [vmem:[%s863 + $0x810] sm:$0xff] %v932
                %v934 = vld [vmem:[%s862 + $0x118] sm:$0xff]
                %935 = vst [vmem:[%s863 + $0x818] sm:$0xff] %v934
                %v936 = vld [vmem:[%s862 + $0x120] sm:$0xff]
                %937 = vst [vmem:[%s863 + $0x820] sm:$0xff] %v936
                %v938 = vld [vmem:[%s862 + $0x128] sm:$0xff]
                %939 = vst [vmem:[%s863 + $0x828] sm:$0xff] %v938
                %v940 = vld [vmem:[%s862 + $0x130] sm:$0xff]
                %941 = vst [vmem:[%s863 + $0x830] sm:$0xff] %v940
                %v942 = vld [vmem:[%s862 + $0x138] sm:$0xff]
                %943 = vst [vmem:[%s863 + $0x838] sm:$0xff] %v942
                %v944 = vld [vmem:[%s862 + $0x140] sm:$0xff]
                %945 = vst [vmem:[%s863 + $0x840] sm:$0xff] %v944
                %v946 = vld [vmem:[%s862 + $0x148] sm:$0xff]
                %947 = vst [vmem:[%s863 + $0x848] sm:$0xff] %v946
                %v948 = vld [vmem:[%s862 + $0x150] sm:$0xff]
                %949 = vst [vmem:[%s863 + $0x850] sm:$0xff] %v948
                %v950 = vld [vmem:[%s862 + $0x158] sm:$0xff]
                %951 = vst [vmem:[%s863 + $0x858] sm:$0xff] %v950
                %v952 = vld [vmem:[%s862 + $0x160] sm:$0xff]
                %953 = vst [vmem:[%s863 + $0x860] sm:$0xff] %v952
                %v954 = vld [vmem:[%s862 + $0x168] sm:$0xff]
                %955 = vst [vmem:[%s863 + $0x868] sm:$0xff] %v954
                %v956 = vld [vmem:[%s862 + $0x170] sm:$0xff]
                %957 = vst [vmem:[%s863 + $0x870] sm:$0xff] %v956
                %v958 = vld [vmem:[%s862 + $0x178] sm:$0xff]
                %959 = vst [vmem:[%s863 + $0x878] sm:$0xff] %v958
                %v960 = vld [vmem:[%s862 + $0x180] sm:$0xff]
                %961 = vst [vmem:[%s863 + $0x880] sm:$0xff] %v960
                %v962 = vld [vmem:[%s862 + $0x188] sm:$0xff]
                %963 = vst [vmem:[%s863 + $0x888] sm:$0xff] %v962
                %v964 = vld [vmem:[%s862 + $0x190] sm:$0xff]
                %965 = vst [vmem:[%s863 + $0x890] sm:$0xff] %v964
                %v966 = vld [vmem:[%s862 + $0x198] sm:$0xff]
                %967 = vst [vmem:[%s863 + $0x898] sm:$0xff] %v966
                %v968 = vld [vmem:[%s862 + $0x1a0] sm:$0xff]
                %969 = vst [vmem:[%s863 + $0x8a0] sm:$0xff] %v968
                %v970 = vld [vmem:[%s862 + $0x1a8] sm:$0xff]
                %971 = vst [vmem:[%s863 + $0x8a8] sm:$0xff] %v970
                %v972 = vld [vmem:[%s862 + $0x1b0] sm:$0xff]
                %973 = vst [vmem:[%s863 + $0x8b0] sm:$0xff] %v972
                %v974 = vld [vmem:[%s862 + $0x1b8] sm:$0xff]
                %975 = vst [vmem:[%s863 + $0x8b8] sm:$0xff] %v974
                %v976 = vld [vmem:[%s862 + $0x1c0] sm:$0xff]
                %977 = vst [vmem:[%s863 + $0x8c0] sm:$0xff] %v976
                %v978 = vld [vmem:[%s862 + $0x1c8] sm:$0xff]
                %979 = vst [vmem:[%s863 + $0x8c8] sm:$0xff] %v978
                %v980 = vld [vmem:[%s862 + $0x1d0] sm:$0xff]
                %981 = vst [vmem:[%s863 + $0x8d0] sm:$0xff] %v980
                %v982 = vld [vmem:[%s862 + $0x1d8] sm:$0xff]
                %983 = vst [vmem:[%s863 + $0x8d8] sm:$0xff] %v982
                %v984 = vld [vmem:[%s862 + $0x1e0] sm:$0xff]
                %985 = vst [vmem:[%s863 + $0x8e0] sm:$0xff] %v984
                %v986 = vld [vmem:[%s862 + $0x1e8] sm:$0xff]
                %987 = vst [vmem:[%s863 + $0x8e8] sm:$0xff] %v986
                %v988 = vld [vmem:[%s862 + $0x1f0] sm:$0xff]
                %989 = vst [vmem:[%s863 + $0x8f0] sm:$0xff] %v988
                %v990 = vld [vmem:[%s862 + $0x1f8] sm:$0xff]
                %991 = vst [vmem:[%s863 + $0x8f8] sm:$0xff] %v990
              $region61: #{a_call__.1} parent=55 // loop_footer
                %s861 = sadd.s32 1, %s857
              $region62: #{a_call__.1} parent=55 // loop_footer_branch
                %856 = sbr.rel target = $region58
              $region63: #{a_call__.1} parent=55 // loop_exit
                _
            $region56: #{a_call__.1} parent=47 // pred_fallthru
              _
          $region48: #{a_call__.1} parent=43 // pred_fallthru
            _
          %1132 = vnop
        $region44: #{a_call__.1} parent=31 // pred_fallthru
          _
      $region32: #{a_call__.1} parent=5 // pred_fallthru
        _
      %p1133 = scmp.le.s32.totalorder 2, %s15
      // Predicated region
      $region79: #{a_call__.1} parent=5 // pred_check
        %p1134 = pneg %p1133
      $region80: #{a_call__.1} parent=5 // pred_check_branch
        %1136 = sbr.rel (%p1134) target = $region82
      $region81: #{a_call__.1} parent=5 // pred_region
        %s1137 = ssub.s32 %s15, 2
        // Predicated region
        $region83: #{a_call__.1} parent=81 // pred_check
          %p1138 = pneg %p117
        $region84: #{a_call__.1} parent=81 // pred_check_branch
          %1140 = sbr.rel (%p1138) target = $region86
        $region85: #{a_call__.1} parent=81 // pred_region
          %s1141 = sand.u32 %s102, 1
          %s1142 = sand.u32 %s102, 1
          %s1143 = smul.addr %s1142, 512
          %s1144 = scalar_lea.vmem [#allocation6], %s1143
        $region86: #{a_call__.1} parent=81 // pred_fallthru
          _
      $region82: #{a_call__.1} parent=5 // pred_fallthru
        _
    $region6: #{a_call__.1} parent=1 // loop_footer
      %s19 = sadd.s32 1, %s15
    $region7: #{a_call__.1} parent=1 // loop_footer_branch
      %14 = sbr.rel target = $region3
    $region8: #{a_call__.1} parent=1 // loop_exit
      _
    %1145 = vsyncpa [#allocation3], 1
    %s1146 = scalar_lea.sflag [#allocation3], 1
    %1147 = vsyncpa %s1146, 1
    %1148 = vsyncpa [#allocation5], 1
    %s1149 = scalar_lea.sflag [#allocation5], 1
    %1150 = vsyncpa %s1149, 1

</llo_original>
